<compile_context>
chip_gen: v6e
topology: v6e:2x2x1
jax: 0.10.0
libtpu: 0.0.40
codegen_flags: <defaults>
</compile_context>

<pallas_src>
import functools

import jax
import jax.numpy as jnp
from jax.experimental import pallas as pl
from jax.experimental.pallas import tpu as pltpu

_LANE = 128        # lane (last-dim) granularity
_SUBLANE = 8       # sublane (second-to-last dim) granularity
_NEG_SLOPE = 0.01  # nn.LeakyReLU default negative_slope


def _round_up(n, m):
    return ((n + m - 1) // m) * m


def _mlp_fused_kernel(x_ref, *refs, n_layers, act_dtype, return_hidden):
    """refs = (w_0, ..., w_{n-1}, [hidden_emb_ref,] h_ref).

    hidden = x @ W0                       (pre-activation, optionally stored)
    h = hidden
    for Wi in W1..W_{n-1}:
        h = leaky_relu(h)                 (Dropout == identity in eval mode)
        h = h @ Wi
    """
    w_refs = refs[:n_layers]
    if return_hidden:
        hidden_ref, h_ref = refs[n_layers], refs[n_layers + 1]
    else:
        h_ref = refs[n_layers]

    # First layer: x is unpadded in the feature dim; W0 is only out-dim padded.
    h = jnp.dot(x_ref[...], w_refs[0][...], preferred_element_type=jnp.float32)
    if return_hidden:
        hidden_ref[...] = h.astype(hidden_ref.dtype)

    neg = jnp.asarray(_NEG_SLOPE, act_dtype)
    for w_ref in w_refs[1:]:
        a = h.astype(act_dtype)                 # downcast before activation (VPU)
        a = jnp.where(a > 0, a, neg * a)        # LeakyReLU; padded lanes stay 0
        h = jnp.dot(a, w_ref[...], preferred_element_type=jnp.float32)
    h_ref[...] = h.astype(h_ref.dtype)


def init_weights(arch, key):
    """nn.Linear-style init: uniform(-1/sqrt(fan_in), 1/sqrt(fan_in)).

    Returns UNPADDED f32 weights stored as [in, out] (torch weight.T) so the
    kernel computes x @ W directly.
    """
    weights = []
    for i in range(1, len(arch)):
        key, sub = jax.random.split(key)
        bound = 1.0 / jnp.sqrt(jnp.float32(arch[i - 1]))
        weights.append(jax.random.uniform(
            sub, (arch[i - 1], arch[i]), dtype=jnp.float32,
            minval=-bound, maxval=bound))
    return weights


def pad_weights(weights, dtype=jnp.bfloat16):
    """Pad weights once, in the production dtype.

    Layer 0 keeps its true input dim (x is not lane-padded); its output dim and
    every later layer's in/out dims are zero-padded to 128 lanes.  Zero padding
    is semantics-preserving (LeakyReLU(0)=0, padded rows contribute 0).
    """
    padded = []
    for idx, w in enumerate(weights):
        din, dout = w.shape
        din_p = din if idx == 0 else _round_up(din, _LANE)
        dout_p = _round_up(dout, _LANE)
        wp = jnp.zeros((din_p, dout_p), dtype)
        padded.append(wp.at[:din, :dout].set(w.astype(dtype)))
    return padded


def mlp_forward(x, padded_weights, arch, *, tm=512, return_hidden=True,
                weight_buffer_count=None):
    """Fused MLP forward.

    x:               [B, arch[0]] (unpadded)
    padded_weights:  output of pad_weights() (also fixes the IO/compute dtype)
    arch:            true layer widths, e.g. [32, 64, 48, 16]
    return_hidden:   if False, skip the hidden_emb HBM write entirely
    weight_buffer_count: pass 1 on v7x to single-buffer the (constant-index)
                     weight blocks and halve their VMEM footprint.

    Returns (hidden_emb [B, arch[1]], h [B, arch[-1]]) or just h.
    """
    B, din = x.shape
    assert din == arch[0]
    n_layers = len(padded_weights)
    io_dtype = padded_weights[0].dtype
    dims_pad = [din] + [w.shape[1] for w in padded_weights]

    # ---- batch tiling (only the batch tail is ever padded) ----
    b_pad = _round_up(B, _SUBLANE)
    tm_eff = min(_round_up(tm, _SUBLANE), b_pad)
    # v7x megacore: if the batch is large enough, keep >=2 tiles on the
    # "parallel" axis so both TensorCores get work.
    if b_pad >= 512 and tm_eff >= b_pad:
        tm_eff = _round_up(pl.cdiv(b_pad, 2), 256)
    b_total = _round_up(b_pad, tm_eff)
    grid = (b_total // tm_eff,)

    x_in = x.astype(io_dtype)
    if b_total != B:
        x_in = jnp.pad(x_in, ((0, b_total - B), (0, 0)))

    # ---- specs ----
    w_spec_kwargs = {}
    if weight_buffer_count is not None:
        w_spec_kwargs["pipeline_mode"] = pl.Buffered(weight_buffer_count)

    in_specs = [pl.BlockSpec((tm_eff, din), lambda i: (i, 0))]
    for w in padded_weights:
        # Full-array weight block, constant index_map -> fetched once, VMEM-resident.
        in_specs.append(pl.BlockSpec(w.shape, lambda i: (0, 0), **w_spec_kwargs))

    out_specs = []
    out_shape = []
    if return_hidden:
        out_specs.append(pl.BlockSpec((tm_eff, dims_pad[1]), lambda i: (i, 0)))
        out_shape.append(jax.ShapeDtypeStruct((b_total, dims_pad[1]), io_dtype))
    out_specs.append(pl.BlockSpec((tm_eff, dims_pad[-1]), lambda i: (i, 0)))
    out_shape.append(jax.ShapeDtypeStruct((b_total, dims_pad[-1]), io_dtype))
    out_shape = tuple(out_shape)

    # ---- explicit VMEM budget: 2x(x blk) + weights + 2x(out blks) + headroom ----
    isz = jnp.dtype(io_dtype).itemsize
    w_buf = 1 if weight_buffer_count == 1 else 2
    need = (2 * tm_eff * din * isz
            + w_buf * sum(int(w.size) * w.dtype.itemsize for w in padded_weights)
            + 2 * tm_eff * (dims_pad[-1] + (dims_pad[1] if return_hidden else 0)) * isz)
    vmem_limit = int(min(max(2 * need + (2 << 20), 16 << 20), 64 << 20))

    kernel = functools.partial(
        _mlp_fused_kernel, n_layers=n_layers, act_dtype=io_dtype,
        return_hidden=return_hidden)

    outs = pl.pallas_call(
        kernel,
        out_shape=out_shape,
        grid_spec=pltpu.PrefetchScalarGridSpec(
            num_scalar_prefetch=0,
            grid=grid,
            in_specs=in_specs,
            out_specs=out_specs,
        ),
        compiler_params=pltpu.CompilerParams(
            dimension_semantics=("parallel",),   # batch tiles shard across TCs
            vmem_limit_bytes=vmem_limit,
        ),
    )(x_in, *padded_weights)

    if return_hidden:
        hidden_pad, h_pad = outs
        return hidden_pad[:B, :arch[1]], h_pad[:B, :arch[-1]]
    (h_pad,) = outs
    return h_pad[:B, :arch[-1]]


if __name__ == "__main__":
    # Small, forward-consistent shapes: batch=8, arch = [32, 64, 48, 16]
    arch = [32, 64, 48, 16]
    batch = 8

    key = jax.random.PRNGKey(0)
    key, kx = jax.random.split(key)
    x = jax.random.normal(kx, (batch, arch[0]), dtype=jnp.float32)
    weights = init_weights(arch, key)

    # Pure-JAX reference of the same semantics (Dropout == identity in eval).
    ref_hidden = x @ weights[0]
    ref_h = ref_hidden
    for w in weights[1:]:
        ref_h = jnp.where(ref_h > 0, ref_h, _NEG_SLOPE * ref_h) @ w

    # ---- f32 path: exact correctness check ----
    wpad_f32 = pad_weights(weights, dtype=jnp.float32)
    hidden_emb, h = mlp_forward(x, wpad_f32, arch)
    jax.block_until_ready((hidden_emb, h))
    assert hidden_emb.shape == (batch, arch[1]) and h.shape == (batch, arch[-1])
    assert jnp.allclose(hidden_emb, ref_hidden, atol=1e-5, rtol=1e-5)
    assert jnp.allclose(h, ref_h, atol=1e-5, rtol=1e-5)

    # ---- bf16 production path: half the HBM streams; loose tolerance expected ----
    wpad_bf16 = pad_weights(weights, dtype=jnp.bfloat16)
    hidden_bf, h_bf = mlp_forward(x, wpad_bf16, arch)
    jax.block_until_ready((hidden_bf, h_bf))
    assert jnp.allclose(hidden_bf.astype(jnp.float32), ref_hidden, atol=0.1, rtol=0.1)
    assert jnp.allclose(h_bf.astype(jnp.float32), ref_h, atol=0.1, rtol=0.1)

    # ---- h-only path: skips the hidden_emb HBM write entirely ----
    h_only = mlp_forward(x, wpad_f32, arch, return_hidden=False)
    jax.block_until_ready(h_only)
    assert jnp.allclose(h_only, ref_h, atol=1e-5, rtol=1e-5)

    # ---- v7x-friendly single-buffered weights (best-effort; older jax may lack it) ----
    try:
        h_sb = mlp_forward(x, wpad_f32, arch, return_hidden=False,
                           weight_buffer_count=1)
        jax.block_until_ready(h_sb)
        assert jnp.allclose(h_sb, ref_h, atol=1e-5, rtol=1e-5)
    except Exception:
        pass  # fall back silently to default double-buffered weight blocks

    print("KERNEL_OK")
</pallas_src>

<mosaic_0001>
module attributes {stable_mosaic.version = 11 : i64} {
  func.func @_mlp_fused_kernel(%arg0: i32, %arg1: memref<8x32xf32, #tpu.memory_space<vmem>>, %arg2: memref<32x128xf32, #tpu.memory_space<vmem>>, %arg3: memref<128x128xf32, #tpu.memory_space<vmem>>, %arg4: memref<128x128xf32, #tpu.memory_space<vmem>>, %arg5: memref<8x128xf32, #tpu.memory_space<vmem>>, %arg6: memref<8x128xf32, #tpu.memory_space<vmem>>) attributes {dimension_semantics = [#tpu.dimension_semantics<parallel>], iteration_bounds = array<i64: 1>, scalar_prefetch = 0 : i64, scratch_operands = 0 : i64, tpu.core_type = #tpu.core_type<tc>, window_params = [{transform_indices = @transform_0, window_bounds = array<i64: 8, 32>}, {pipeline_mode = #tpu.pipeline_mode<synchronous>, transform_indices = @transform_1, window_bounds = array<i64: 32, 128>}, {pipeline_mode = #tpu.pipeline_mode<synchronous>, transform_indices = @transform_2, window_bounds = array<i64: 128, 128>}, {pipeline_mode = #tpu.pipeline_mode<synchronous>, transform_indices = @transform_3, window_bounds = array<i64: 128, 128>}, {transform_indices = @transform_4, window_bounds = array<i64: 8, 128>}, {transform_indices = @transform_5, window_bounds = array<i64: 8, 128>}]} {
    %c0 = arith.constant 0 : index
    %c0_0 = arith.constant 0 : index
    %0 = vector.load %arg1[%c0, %c0_0] : memref<8x32xf32, #tpu.memory_space<vmem>>, vector<8x32xf32>
    %c0_1 = arith.constant 0 : index
    %c0_2 = arith.constant 0 : index
    %1 = vector.load %arg2[%c0_1, %c0_2] : memref<32x128xf32, #tpu.memory_space<vmem>>, vector<32x128xf32>
    %cst = arith.constant dense<0.000000e+00> : vector<8x128xf32>
    %2 = tpu.matmul %0, %1, %cst {dimension_numbers = #tpu.dot_dimension_numbers<[1], [0], [0], [1], [0, 0, 1, 1], [], []>} : vector<8x32xf32>, vector<32x128xf32>, vector<8x128xf32> -> vector<8x128xf32>
    %c0_3 = arith.constant 0 : index
    %c0_4 = arith.constant 0 : index
    %3 = vector.load %arg5[%c0_3, %c0_4] : memref<8x128xf32, #tpu.memory_space<vmem>>, vector<8x128xf32>
    tpu.vector_store %arg5[%c0_3, %c0_4], %2 {strides = array<i32>} : memref<8x128xf32, #tpu.memory_space<vmem>>, vector<8x128xf32>,
    %cst_5 = arith.constant 0.000000e+00 : f32
    %4 = vector.broadcast %cst_5 : f32 to vector<8x128xf32>
    %5 = arith.cmpf ogt, %2, %4 : vector<8x128xf32>
    %cst_6 = arith.constant 0.00999999977 : f32
    %6 = vector.broadcast %cst_6 : f32 to vector<8x128xf32>
    %7 = arith.mulf %6, %2 : vector<8x128xf32>
    %8 = arith.select %5, %2, %7 : vector<8x128xi1>, vector<8x128xf32>
    %c0_7 = arith.constant 0 : index
    %c0_8 = arith.constant 0 : index
    %9 = vector.load %arg3[%c0_7, %c0_8] : memref<128x128xf32, #tpu.memory_space<vmem>>, vector<128x128xf32>
    %cst_9 = arith.constant dense<0.000000e+00> : vector<8x128xf32>
    %10 = tpu.matmul %8, %9, %cst_9 {dimension_numbers = #tpu.dot_dimension_numbers<[1], [0], [0], [1], [0, 0, 1, 1], [], []>} : vector<8x128xf32>, vector<128x128xf32>, vector<8x128xf32> -> vector<8x128xf32>
    %cst_10 = arith.constant 0.000000e+00 : f32
    %11 = vector.broadcast %cst_10 : f32 to vector<8x128xf32>
    %12 = arith.cmpf ogt, %10, %11 : vector<8x128xf32>
    %cst_11 = arith.constant 0.00999999977 : f32
    %13 = vector.broadcast %cst_11 : f32 to vector<8x128xf32>
    %14 = arith.mulf %13, %10 : vector<8x128xf32>
    %15 = arith.select %12, %10, %14 : vector<8x128xi1>, vector<8x128xf32>
    %c0_12 = arith.constant 0 : index
    %c0_13 = arith.constant 0 : index
    %16 = vector.load %arg4[%c0_12, %c0_13] : memref<128x128xf32, #tpu.memory_space<vmem>>, vector<128x128xf32>
    %cst_14 = arith.constant dense<0.000000e+00> : vector<8x128xf32>
    %17 = tpu.matmul %15, %16, %cst_14 {dimension_numbers = #tpu.dot_dimension_numbers<[1], [0], [0], [1], [0, 0, 1, 1], [], []>} : vector<8x128xf32>, vector<128x128xf32>, vector<8x128xf32> -> vector<8x128xf32>
    %c0_15 = arith.constant 0 : index
    %c0_16 = arith.constant 0 : index
    %18 = vector.load %arg6[%c0_15, %c0_16] : memref<8x128xf32, #tpu.memory_space<vmem>>, vector<8x128xf32>
    tpu.vector_store %arg6[%c0_15, %c0_16], %17 {strides = array<i32>} : memref<8x128xf32, #tpu.memory_space<vmem>>, vector<8x128xf32>,
    return
  }
  func.func @transform_0(%arg0: i32) -> (i32, i32) {
    %c0_i32 = arith.constant 0 : i32
    %c0_i32_0 = arith.constant 0 : i32
    return %arg0, %c0_i32 : i32, i32
  }
  func.func @transform_1(%arg0: i32) -> (i32, i32) {
    %c0_i32 = arith.constant 0 : i32
    %c0_i32_0 = arith.constant 0 : i32
    %c0_i32_1 = arith.constant 0 : i32
    return %c0_i32, %c0_i32_0 : i32, i32
  }
  func.func @transform_2(%arg0: i32) -> (i32, i32) {
    %c0_i32 = arith.constant 0 : i32
    %c0_i32_0 = arith.constant 0 : i32
    %c0_i32_1 = arith.constant 0 : i32
    return %c0_i32, %c0_i32_0 : i32, i32
  }
  func.func @transform_3(%arg0: i32) -> (i32, i32) {
    %c0_i32 = arith.constant 0 : i32
    %c0_i32_0 = arith.constant 0 : i32
    %c0_i32_1 = arith.constant 0 : i32
    return %c0_i32, %c0_i32_0 : i32, i32
  }
  func.func @transform_4(%arg0: i32) -> (i32, i32) {
    %c0_i32 = arith.constant 0 : i32
    %c0_i32_0 = arith.constant 0 : i32
    return %arg0, %c0_i32 : i32, i32
  }
  func.func @transform_5(%arg0: i32) -> (i32, i32) {
    %c0_i32 = arith.constant 0 : i32
    %c0_i32_0 = arith.constant 0 : i32
    return %arg0, %c0_i32 : i32, i32
  }
}

</mosaic_0001>

<llo_original>
// kernel: tpu_custom_call.1
$region0: #{tpu_custom_call.1}
  #allocation0 [shape = 'u32[]', space=smem, size = 0x4, offset = 0x4, fixed_abs, tag = 'smem constant byte address 0x4 - core index']
  #allocation1 [shape = 'u32[144,128]{1,0:T(1,128)}', space=vmem, size = 0x12000, scoped, tag = 'internal scratch']
  %s0 = inlined_call_operand.hbm [shape: f32[8,32], index: 0, kind: input, shape index: {}]
  %s1 = inlined_call_operand.hbm [shape: f32[32,128], index: 1, kind: input, shape index: {}]
  %s2 = inlined_call_operand.hbm [shape: f32[128,128], index: 2, kind: input, shape index: {}]
  %s3 = inlined_call_operand.hbm [shape: f32[128,128], index: 3, kind: input, shape index: {}]
  %s4 = inlined_call_operand.hbm [shape: f32[8,128], index: 4, kind: output, shape index: {0}]
  %s5 = inlined_call_operand.hbm [shape: f32[8,128], index: 5, kind: output, shape index: {1}]
  %6 = xla_tuple %s4, %s5
  %s7 = sld [smem:[#allocation0]]
  $region50: #{tpu_custom_call.1} parent=0
    _
  %s9 = ssub.s32 1, %s7
  %s10 = scalar_select 0, %s9, %s7
  $region1: #{tpu_custom_call.1} parent=0
    #allocation2 [shape = 'u8[4096]{0}', space=vmem, size = 0x1000, scoped, tag = 'input window, operand 0, single buffered']
    #allocation3 [shape = 's32[1]{0}', space=sflag, size = 0x4, scoped, tag = 'scoped memory for tpu_custom_call.1']
    #allocation4 [shape = 's32[1]{0}', space=sflag, size = 0x4, scoped, tag = 'scoped memory for tpu_custom_call.1']
    #allocation5 [shape = 'u8[16384]{0}', space=vmem, size = 0x4000, scoped, tag = 'input window, operand 1, single buffered']
    #allocation6 [shape = 's32[1]{0}', space=sflag, size = 0x4, scoped, tag = 'scoped memory for tpu_custom_call.1']
    #allocation7 [shape = 'u8[65536]{0}', space=vmem, size = 0x10000, scoped, tag = 'input window, operand 2, single buffered']
    #allocation8 [shape = 'u8[65536]{0}', space=vmem, size = 0x10000, scoped, tag = 'input window, operand 3, single buffered']
    #allocation9 [shape = 's32[1]{0}', space=sflag, size = 0x4, scoped, tag = 'scoped memory for tpu_custom_call.1']
    #allocation10 [shape = 'u8[4096]{0}', space=vmem, size = 0x1000, scoped, tag = 'output window, operand 0, single buffered']
    #allocation11 [shape = 'u8[4096]{0}', space=vmem, size = 0x1000, scoped, tag = 'output window, operand 1, single buffered']
    #allocation12 [shape = 's32[1]{0}', space=sflag, size = 0x4, scoped, tag = 'scoped memory for tpu_custom_call.1']
    %11 = vsyncpa [#allocation3], 0
    %12 = vsyncpa [#allocation6], 0
    %13 = vsyncpa [#allocation9], 0
    %14 = vsyncpa [#allocation4], 0
    %15 = vsyncpa [#allocation12], 0
    // Predicated region
    $region2: #{tpu_custom_call.1} parent=1 // pred_check
      _
    $region3: #{tpu_custom_call.1} parent=1 // pred_check_branch
      %17 = sbr.rel (0) target = $region5
    $region4: #{tpu_custom_call.1} parent=1 // pred_region
      %s19 = ssub.s32 128, 128
      %20 = vsyncadd [#allocation3], %s19
      %s22 = sshll.u32 [#allocation2], 4
      %s23 = int_to_ptr.vmem [resolvable:$true] %s22
      %25 = dma.hbm_to_vmem [thread:$0]  %s0, 128, %s23, [#allocation3]
    $region5: #{tpu_custom_call.1} parent=1 // pred_fallthru
      _
    // Predicated region
    $region6: #{tpu_custom_call.1} parent=1 // pred_check
      _
    $region7: #{tpu_custom_call.1} parent=1 // pred_check_branch
      %27 = sbr.rel (0) target = $region9
    $region8: #{tpu_custom_call.1} parent=1 // pred_region
      %s29 = ssub.s32 512, 512
      %30 = vsyncadd [#allocation6], %s29
      %s31 = sshll.u32 [#allocation5], 4
      %s32 = int_to_ptr.vmem [resolvable:$true] %s31
      %37 = dma.hbm_to_vmem [thread:$0]  %s1, 512, %s32, [#allocation6], 128, 128, 8
    $region9: #{tpu_custom_call.1} parent=1 // pred_fallthru
      _
    // Predicated region
    $region10: #{tpu_custom_call.1} parent=1 // pred_check
      _
    $region11: #{tpu_custom_call.1} parent=1 // pred_check_branch
      %39 = sbr.rel (0) target = $region13
    $region12: #{tpu_custom_call.1} parent=1 // pred_region
      %s41 = ssub.s32 2048, 2048
      %42 = vsyncadd [#allocation6], %s41
      %s43 = sshll.u32 [#allocation7], 4
      %s44 = int_to_ptr.vmem [resolvable:$true] %s43
      %49 = dma.hbm_to_vmem [thread:$0]  %s2, 2048, %s44, [#allocation6], 128, 128, 8
    $region13: #{tpu_custom_call.1} parent=1 // pred_fallthru
      _
    // Predicated region
    $region14: #{tpu_custom_call.1} parent=1 // pred_check
      _
    $region15: #{tpu_custom_call.1} parent=1 // pred_check_branch
      %51 = sbr.rel (0) target = $region17
    $region16: #{tpu_custom_call.1} parent=1 // pred_region
      %s53 = ssub.s32 2048, 2048
      %54 = vsyncadd [#allocation9], %s53
      %s55 = sshll.u32 [#allocation8], 4
      %s56 = int_to_ptr.vmem [resolvable:$true] %s55
      %61 = dma.hbm_to_vmem [thread:$0]  %s3, 2048, %s56, [#allocation9], 128, 128, 8
    $region17: #{tpu_custom_call.1} parent=1 // pred_fallthru
      _
    // Predicated region
    $region18: #{tpu_custom_call.1} parent=1 // pred_check
      _
    $region19: #{tpu_custom_call.1} parent=1 // pred_check_branch
      %63 = sbr.rel (0) target = $region21
    $region20: #{tpu_custom_call.1} parent=1 // pred_region
      %64 = dma.done [#allocation3], 128
    $region21: #{tpu_custom_call.1} parent=1 // pred_fallthru
      _
    // Predicated region
    $region22: #{tpu_custom_call.1} parent=1 // pred_check
      _
    $region23: #{tpu_custom_call.1} parent=1 // pred_check_branch
      %66 = sbr.rel (0) target = $region25
    $region24: #{tpu_custom_call.1} parent=1 // pred_region
      %67 = dma.done [#allocation6], 512
    $region25: #{tpu_custom_call.1} parent=1 // pred_fallthru
      _
    // Predicated region
    $region26: #{tpu_custom_call.1} parent=1 // pred_check
      _
    $region27: #{tpu_custom_call.1} parent=1 // pred_check_branch
      %69 = sbr.rel (0) target = $region29
    $region28: #{tpu_custom_call.1} parent=1 // pred_region
      %70 = dma.done [#allocation6], 2048
    $region29: #{tpu_custom_call.1} parent=1 // pred_fallthru
      _
    // Predicated region
    $region30: #{tpu_custom_call.1} parent=1 // pred_check
      _
    $region31: #{tpu_custom_call.1} parent=1 // pred_check_branch
      %72 = sbr.rel (0) target = $region33
    $region32: #{tpu_custom_call.1} parent=1 // pred_region
      %73 = dma.done [#allocation9], 2048
    $region33: #{tpu_custom_call.1} parent=1 // pred_fallthru
      _
    %v74 = vld [vmem:[#allocation2] sm:$0xff]
    %v75 = vld [vmem:[#allocation5] sm:$0xff]
    %v76 = vld [vmem:[#allocation5 + $0x8] sm:$0xff]
    %v77 = vld [vmem:[#allocation5 + $0x10] sm:$0xff]
    %v78 = vld [vmem:[#allocation5 + $0x18] sm:$0xff]
    %vm79 = vcmask 261120
    %v81 = vsel %vm79, %v74, 0
    %83 = vmatprep.subr.mxu0 0.0
    %84 = vmatpush1.msra.mxu0 0.0
    %85 = vmatprep.subr.mxu0 0.0
    %86 = vmatpush1.msra.mxu0 0.0
    %87 = vmatprep.subr.mxu0 0.0
    %88 = vmatpush1.msra.mxu0 0.0
    %89 = vmatprep.subr.mxu0 0.0
    %90 = vmatpush1.msra.mxu0 0.0
    %91 = vmatprep.subr.mxu0 0.0
    %92 = vmatpush1.msra.mxu0 0.0
    %93 = vmatprep.subr.mxu0 0.0
    %94 = vmatpush1.msra.mxu0 0.0
    %95 = vmatprep.subr.mxu0 0.0
    %96 = vmatpush1.msra.mxu0 0.0
    %97 = vmatprep.subr.mxu0 0.0
    %98 = vmatpush1.msra.mxu0 0.0
    %99 = vmatprep.subr.mxu0 0.0
    %100 = vmatpush1.msra.mxu0 0.0
    %101 = vmatprep.subr.mxu0 0.0
    %102 = vmatpush1.msra.mxu0 0.0
    %103 = vmatprep.subr.mxu0 0.0
    %104 = vmatpush1.msra.mxu0 0.0
    %105 = vmatprep.subr.mxu0 0.0
    %106 = vmatpush1.msra.mxu0 0.0
    %107 = vmatprep.subr.mxu0 0.0
    %108 = vmatpush1.msra.mxu0 %v78
    %109 = vmatprep.subr.mxu0 0.0
    %110 = vmatpush1.msra.mxu0 %v77
    %111 = vmatprep.subr.mxu0 0.0
    %112 = vmatpush1.msra.mxu0 %v76
    %113 = vmatprep.subr.mxu0 0.0
    %114 = vmatpush1.msra.mxu0 %v75
    %115 = vmatprep.subr.mxu0 0.0
    %116 = vmatpush2.msra.mxu0 0.0
    %117 = vmatprep.subr.mxu0 0.0
    %118 = vmatpush2.msra.mxu0 0.0
    %119 = vmatprep.subr.mxu0 0.0
    %120 = vmatpush2.msra.mxu0 0.0
    %121 = vmatprep.subr.mxu0 0.0
    %122 = vmatpush2.msra.mxu0 0.0
    %123 = vmatprep.subr.mxu0 0.0
    %124 = vmatpush2.msra.mxu0 0.0
    %125 = vmatprep.subr.mxu0 0.0
    %126 = vmatpush2.msra.mxu0 0.0
    %127 = vmatprep.subr.mxu0 0.0
    %128 = vmatpush2.msra.mxu0 0.0
    %129 = vmatprep.subr.mxu0 0.0
    %130 = vmatpush2.msra.mxu0 0.0
    %131 = vmatprep.subr.mxu0 0.0
    %132 = vmatpush2.msra.mxu0 0.0
    %133 = vmatprep.subr.mxu0 0.0
    %134 = vmatpush2.msra.mxu0 0.0
    %135 = vmatprep.subr.mxu0 0.0
    %136 = vmatpush2.msra.mxu0 0.0
    %137 = vmatprep.subr.mxu0 0.0
    %138 = vmatpush2.msra.mxu0 0.0
    %139 = vmatprep.subr.mxu0 0.0
    %140 = vmatpush2.msra.mxu0 0.0
    %141 = vmatprep.subr.mxu0 0.0
    %142 = vmatpush2.msra.mxu0 0.0
    %143 = vmatprep.subr.mxu0 0.0
    %144 = vmatpush2.msra.mxu0 0.0
    %145 = vmatprep.subr.mxu0 0.0
    %146 = vmatpush2.msra.mxu0 0.0
    %147 = vmatprep.mubr.f32.mxu0 0.0
    %148 = vmatmul.mubr.f32.gmra.mxu0 %v81
    %v149 = vpop.f32.mrf.mxu0
    %v150 = vadd.f32 0.0, %v149
    %v151 = vpop.f32.mrf.mxu0
    %152 = vdwg.mxu0
    %153 = vst [vmem:[#allocation10] sm:$0xff] %v150
    %vm154 = vcmp.gt.f32.partialorder %v150, 0.0
    %v155 = vmul.f32 %v150, 0.01
    %v156 = vsel %vm154, %v150, %v155
    %v157 = vld [vmem:[#allocation7] sm:$0xff]
    %v158 = vld [vmem:[#allocation7 + $0x8] sm:$0xff]
    %v159 = vld [vmem:[#allocation7 + $0x10] sm:$0xff]
    %v160 = vld [vmem:[#allocation7 + $0x18] sm:$0xff]
    %v161 = vld [vmem:[#allocation7 + $0x20] sm:$0xff]
    %v162 = vld [vmem:[#allocation7 + $0x28] sm:$0xff]
    %v163 = vld [vmem:[#allocation7 + $0x30] sm:$0xff]
    %v164 = vld [vmem:[#allocation7 + $0x38] sm:$0xff]
    %v165 = vld [vmem:[#allocation7 + $0x40] sm:$0xff]
    %v166 = vld [vmem:[#allocation7 + $0x48] sm:$0xff]
    %v167 = vld [vmem:[#allocation7 + $0x50] sm:$0xff]
    %v168 = vld [vmem:[#allocation7 + $0x58] sm:$0xff]
    %v169 = vld [vmem:[#allocation7 + $0x60] sm:$0xff]
    %v170 = vld [vmem:[#allocation7 + $0x68] sm:$0xff]
    %v171 = vld [vmem:[#allocation7 + $0x70] sm:$0xff]
    %v172 = vld [vmem:[#allocation7 + $0x78] sm:$0xff]
    %173 = vmatprep.subr.mxu0 0.0
    %174 = vmatpush1.msra.mxu0 %v172
    %175 = vmatprep.subr.mxu0 0.0
    %176 = vmatpush1.msra.mxu0 %v171
    %177 = vmatprep.subr.mxu0 0.0
    %178 = vmatpush1.msra.mxu0 %v170
    %179 = vmatprep.subr.mxu0 0.0
    %180 = vmatpush1.msra.mxu0 %v169
    %181 = vmatprep.subr.mxu0 0.0
    %182 = vmatpush1.msra.mxu0 %v168
    %183 = vmatprep.subr.mxu0 0.0
    %184 = vmatpush1.msra.mxu0 %v167
    %185 = vmatprep.subr.mxu0 0.0
    %186 = vmatpush1.msra.mxu0 %v166
    %187 = vmatprep.subr.mxu0 0.0
    %188 = vmatpush1.msra.mxu0 %v165
    %189 = vmatprep.subr.mxu0 0.0
    %190 = vmatpush1.msra.mxu0 %v164
    %191 = vmatprep.subr.mxu0 0.0
    %192 = vmatpush1.msra.mxu0 %v163
    %193 = vmatprep.subr.mxu0 0.0
    %194 = vmatpush1.msra.mxu0 %v162
    %195 = vmatprep.subr.mxu0 0.0
    %196 = vmatpush1.msra.mxu0 %v161
    %197 = vmatprep.subr.mxu0 0.0
    %198 = vmatpush1.msra.mxu0 %v160
    %199 = vmatprep.subr.mxu0 0.0
    %200 = vmatpush1.msra.mxu0 %v159
    %201 = vmatprep.subr.mxu0 0.0
    %202 = vmatpush1.msra.mxu0 %v158
    %203 = vmatprep.subr.mxu0 0.0
    %204 = vmatpush1.msra.mxu0 %v157
    %205 = vmatprep.subr.mxu0 0.0
    %206 = vmatpush2.msra.mxu0 0.0
    %207 = vmatprep.subr.mxu0 0.0
    %208 = vmatpush2.msra.mxu0 0.0
    %209 = vmatprep.subr.mxu0 0.0
    %210 = vmatpush2.msra.mxu0 0.0
    %211 = vmatprep.subr.mxu0 0.0
    %212 = vmatpush2.msra.mxu0 0.0
    %213 = vmatprep.subr.mxu0 0.0
    %214 = vmatpush2.msra.mxu0 0.0
    %215 = vmatprep.subr.mxu0 0.0
    %216 = vmatpush2.msra.mxu0 0.0
    %217 = vmatprep.subr.mxu0 0.0
    %218 = vmatpush2.msra.mxu0 0.0
    %219 = vmatprep.subr.mxu0 0.0
    %220 = vmatpush2.msra.mxu0 0.0
    %221 = vmatprep.subr.mxu0 0.0
    %222 = vmatpush2.msra.mxu0 0.0
    %223 = vmatprep.subr.mxu0 0.0
    %224 = vmatpush2.msra.mxu0 0.0
    %225 = vmatprep.subr.mxu0 0.0
    %226 = vmatpush2.msra.mxu0 0.0
    %227 = vmatprep.subr.mxu0 0.0
    %228 = vmatpush2.msra.mxu0 0.0
    %229 = vmatprep.subr.mxu0 0.0
    %230 = vmatpush2.msra.mxu0 0.0
    %231 = vmatprep.subr.mxu0 0.0
    %232 = vmatpush2.msra.mxu0 0.0
    %233 = vmatprep.subr.mxu0 0.0
    %234 = vmatpush2.msra.mxu0 0.0
    %235 = vmatprep.subr.mxu0 0.0
    %236 = vmatpush2.msra.mxu0 0.0
    %237 = vmatprep.mubr.f32.mxu0 0.0
    %238 = vmatmul.mubr.f32.gmra.mxu0 %v156
    %v239 = vpop.f32.mrf.mxu0
    %v240 = vadd.f32 0.0, %v239
    %v241 = vpop.f32.mrf.mxu0
    %242 = vdwg.mxu0
    %vm243 = vcmp.gt.f32.partialorder %v240, 0.0
    %v244 = vmul.f32 %v240, 0.01
    %v245 = vsel %vm243, %v240, %v244
    %v246 = vld [vmem:[#allocation8] sm:$0xff]
    %v247 = vld [vmem:[#allocation8 + $0x8] sm:$0xff]
    %v248 = vld [vmem:[#allocation8 + $0x10] sm:$0xff]
    %v249 = vld [vmem:[#allocation8 + $0x18] sm:$0xff]
    %v250 = vld [vmem:[#allocation8 + $0x20] sm:$0xff]
    %v251 = vld [vmem:[#allocation8 + $0x28] sm:$0xff]
    %v252 = vld [vmem:[#allocation8 + $0x30] sm:$0xff]
    %v253 = vld [vmem:[#allocation8 + $0x38] sm:$0xff]
    %v254 = vld [vmem:[#allocation8 + $0x40] sm:$0xff]
    %v255 = vld [vmem:[#allocation8 + $0x48] sm:$0xff]
    %v256 = vld [vmem:[#allocation8 + $0x50] sm:$0xff]
    %v257 = vld [vmem:[#allocation8 + $0x58] sm:$0xff]
    %v258 = vld [vmem:[#allocation8 + $0x60] sm:$0xff]
    %v259 = vld [vmem:[#allocation8 + $0x68] sm:$0xff]
    %v260 = vld [vmem:[#allocation8 + $0x70] sm:$0xff]
    %v261 = vld [vmem:[#allocation8 + $0x78] sm:$0xff]
    %262 = vmatprep.subr.mxu0 0.0
    %263 = vmatpush1.msra.mxu0 %v261
    %264 = vmatprep.subr.mxu0 0.0
    %265 = vmatpush1.msra.mxu0 %v260
    %266 = vmatprep.subr.mxu0 0.0
    %267 = vmatpush1.msra.mxu0 %v259
    %268 = vmatprep.subr.mxu0 0.0
    %269 = vmatpush1.msra.mxu0 %v258
    %270 = vmatprep.subr.mxu0 0.0
    %271 = vmatpush1.msra.mxu0 %v257
    %272 = vmatprep.subr.mxu0 0.0
    %273 = vmatpush1.msra.mxu0 %v256
    %274 = vmatprep.subr.mxu0 0.0
    %275 = vmatpush1.msra.mxu0 %v255
    %276 = vmatprep.subr.mxu0 0.0
    %277 = vmatpush1.msra.mxu0 %v254
    %278 = vmatprep.subr.mxu0 0.0
    %279 = vmatpush1.msra.mxu0 %v253
    %280 = vmatprep.subr.mxu0 0.0
    %281 = vmatpush1.msra.mxu0 %v252
    %282 = vmatprep.subr.mxu0 0.0
    %283 = vmatpush1.msra.mxu0 %v251
    %284 = vmatprep.subr.mxu0 0.0
    %285 = vmatpush1.msra.mxu0 %v250
    %286 = vmatprep.subr.mxu0 0.0
    %287 = vmatpush1.msra.mxu0 %v249
    %288 = vmatprep.subr.mxu0 0.0
    %289 = vmatpush1.msra.mxu0 %v248
    %290 = vmatprep.subr.mxu0 0.0
    %291 = vmatpush1.msra.mxu0 %v247
    %292 = vmatprep.subr.mxu0 0.0
    %293 = vmatpush1.msra.mxu0 %v246
    %294 = vmatprep.subr.mxu0 0.0
    %295 = vmatpush2.msra.mxu0 0.0
    %296 = vmatprep.subr.mxu0 0.0
    %297 = vmatpush2.msra.mxu0 0.0
    %298 = vmatprep.subr.mxu0 0.0
    %299 = vmatpush2.msra.mxu0 0.0
    %300 = vmatprep.subr.mxu0 0.0
    %301 = vmatpush2.msra.mxu0 0.0
    %302 = vmatprep.subr.mxu0 0.0
    %303 = vmatpush2.msra.mxu0 0.0
    %304 = vmatprep.subr.mxu0 0.0
    %305 = vmatpush2.msra.mxu0 0.0
    %306 = vmatprep.subr.mxu0 0.0
    %307 = vmatpush2.msra.mxu0 0.0
    %308 = vmatprep.subr.mxu0 0.0
    %309 = vmatpush2.msra.mxu0 0.0
    %310 = vmatprep.subr.mxu0 0.0
    %311 = vmatpush2.msra.mxu0 0.0
    %312 = vmatprep.subr.mxu0 0.0
    %313 = vmatpush2.msra.mxu0 0.0
    %314 = vmatprep.subr.mxu0 0.0
    %315 = vmatpush2.msra.mxu0 0.0
    %316 = vmatprep.subr.mxu0 0.0
    %317 = vmatpush2.msra.mxu0 0.0
    %318 = vmatprep.subr.mxu0 0.0
    %319 = vmatpush2.msra.mxu0 0.0
    %320 = vmatprep.subr.mxu0 0.0
    %321 = vmatpush2.msra.mxu0 0.0
    %322 = vmatprep.subr.mxu0 0.0
    %323 = vmatpush2.msra.mxu0 0.0
    %324 = vmatprep.subr.mxu0 0.0
    %325 = vmatpush2.msra.mxu0 0.0
    %326 = vmatprep.mubr.f32.mxu0 0.0
    %327 = vmatmul.mubr.f32.gmra.mxu0 %v245
    %v328 = vpop.f32.mrf.mxu0
    %v329 = vadd.f32 0.0, %v328
    %v330 = vpop.f32.mrf.mxu0
    %331 = vdwg.mxu0
    %332 = vst [vmem:[#allocation11] sm:$0xff] %v329
    // Predicated region
    $region34: #{tpu_custom_call.1} parent=1 // pred_check
      _
    $region35: #{tpu_custom_call.1} parent=1 // pred_check_branch
      %334 = sbr.rel (0) target = $region37
    $region36: #{tpu_custom_call.1} parent=1 // pred_region
      %s336 = ssub.s32 128, 128
      %337 = vsyncadd [#allocation4], %s336
      %s339 = sshll.u32 [#allocation10], 4
      %s340 = int_to_ptr.vmem [resolvable:$true] %s339
      %342 = dma.vmem_to_hbm [thread:$0]  %s340, 128, %s4, [#allocation4]
    $region37: #{tpu_custom_call.1} parent=1 // pred_fallthru
      _
    // Predicated region
    $region38: #{tpu_custom_call.1} parent=1 // pred_check
      _
    $region39: #{tpu_custom_call.1} parent=1 // pred_check_branch
      %344 = sbr.rel (0) target = $region41
    $region40: #{tpu_custom_call.1} parent=1 // pred_region
      %s346 = ssub.s32 128, 128
      %347 = vsyncadd [#allocation12], %s346
      %s349 = sshll.u32 [#allocation11], 4
      %s350 = int_to_ptr.vmem [resolvable:$true] %s349
      %352 = dma.vmem_to_hbm [thread:$0]  %s350, 128, %s5, [#allocation12]
    $region41: #{tpu_custom_call.1} parent=1 // pred_fallthru
      _
    // Predicated region
    $region42: #{tpu_custom_call.1} parent=1 // pred_check
      _
    $region43: #{tpu_custom_call.1} parent=1 // pred_check_branch
      %354 = sbr.rel (0) target = $region45
    $region44: #{tpu_custom_call.1} parent=1 // pred_region
      %355 = dma.done [#allocation4], 128
    $region45: #{tpu_custom_call.1} parent=1 // pred_fallthru
      _
    // Predicated region
    $region46: #{tpu_custom_call.1} parent=1 // pred_check
      _
    $region47: #{tpu_custom_call.1} parent=1 // pred_check_branch
      %357 = sbr.rel (0) target = $region49
    $region48: #{tpu_custom_call.1} parent=1 // pred_region
      %358 = dma.done [#allocation12], 128
    $region49: #{tpu_custom_call.1} parent=1 // pred_fallthru
      _
    %359 = vsyncpa [#allocation3], 1
    %360 = vsyncpa [#allocation6], 1
    %361 = vsyncpa [#allocation9], 1
    %362 = vsyncpa [#allocation4], 1
    %363 = vsyncpa [#allocation12], 1

</llo_original>
